<compile_context>
chip_gen: v6e
topology: v6e:2x2x1
jax: 0.10.0
libtpu: 0.0.40
codegen_flags: <defaults>
</compile_context>

<pallas_src>
import functools

import jax
import jax.numpy as jnp
from jax.experimental import pallas as pl
from jax.experimental.pallas import tpu as pltpu


# ----------------------------- Pallas kernels -----------------------------

def _bias_matmul_kernel(x_ref, w_ref, b_ref, o_ref):
    # x_ref: (bm, K) bf16 ; w_ref: (K, N) bf16 ; b_ref: (1, N) f32 ; o_ref: (bm, N)
    y = jnp.dot(x_ref[...], w_ref[...], preferred_element_type=jnp.float32)
    o_ref[...] = (y + b_ref[...]).astype(o_ref.dtype)


def _flash_attn_kernel(q_ref, k_ref, v_ref, o_ref, m_ref, l_ref, acc_ref,
                       *, block_q, block_k, heads_per_group, head_dim,
                       masked_bias):
    # q_ref: (bq, G*hd), k_ref/v_ref: (bk, G*hd) bf16 ; o_ref: (bq, G*hd)
    # m_ref/l_ref: (bq, G) f32 ; acc_ref: (bq, G*hd) f32
    G, hd = heads_per_group, head_dim
    qi = pl.program_id(1)
    ki = pl.program_id(2)

    @pl.when(ki == 0)
    def _init():
        m_ref[...] = jnp.full(m_ref.shape, -jnp.inf, m_ref.dtype)
        l_ref[...] = jnp.zeros(l_ref.shape, l_ref.dtype)
        acc_ref[...] = jnp.zeros(acc_ref.shape, acc_ref.dtype)

    def _online_softmax_step(masked):
        if masked:
            # 1-D iotas broadcast to (bq, bk); built once, shared by all G heads.
            row = qi * block_q + jax.lax.broadcasted_iota(jnp.int32, (block_q, 1), 0)
            col = ki * block_k + jax.lax.broadcasted_iota(jnp.int32, (1, block_k), 1)
            causal = col <= row
        for g in range(G):
            lo, hi = g * hd, (g + 1) * hd
            # q @ k^T without materializing a transpose (q pre-scaled by 1/sqrt(hd)).
            s = jax.lax.dot_general(q_ref[:, lo:hi], k_ref[:, lo:hi],
                                    (((1,), (1,)), ((), ())),
                                    preferred_element_type=jnp.float32)  # (bq, bk)
            if masked:
                s = jnp.where(causal, s, masked_bias)
            m_prev = m_ref[:, g:g + 1]
            m_new = jnp.maximum(m_prev, jnp.max(s, axis=-1, keepdims=True))
            alpha = jnp.exp(m_prev - m_new)
            p = jnp.exp(s - m_new)
            l_ref[:, g:g + 1] = alpha * l_ref[:, g:g + 1] + jnp.sum(
                p, axis=-1, keepdims=True)
            pv = jnp.dot(p.astype(v_ref.dtype), v_ref[:, lo:hi],
                         preferred_element_type=jnp.float32)
            acc_ref[:, lo:hi] = alpha * acc_ref[:, lo:hi] + pv
            m_ref[:, g:g + 1] = m_new

    # Tile relation to the causal diagonal (skip / unmasked / masked).
    needs_compute = ki * block_k <= (qi + 1) * block_q - 1
    fully_visible = (ki + 1) * block_k - 1 <= qi * block_q

    @pl.when(needs_compute & fully_visible)
    def _no_mask():
        _online_softmax_step(masked=False)

    @pl.when(needs_compute & jnp.logical_not(fully_visible))
    def _with_mask():
        _online_softmax_step(masked=True)

    @pl.when(ki == pl.num_programs(2) - 1)
    def _finalize():
        outs = []
        for g in range(G):
            lo, hi = g * hd, (g + 1) * hd
            inv = pl.reciprocal(l_ref[:, g:g + 1], approx=True)
            outs.append(acc_ref[:, lo:hi] * inv)
        # single lane-dense store of the head-merged tile
        o_ref[...] = jnp.concatenate(outs, axis=-1).astype(o_ref.dtype)


# ----------------------------- helpers -----------------------------

def _fit_tile(dim, target, aligns):
    """Largest multiple of an alignment <= target that evenly divides dim; else dim."""
    if dim <= target:
        return dim
    for align in aligns:
        if dim % align == 0:
            t = (target // align) * align
            while t >= align:
                if dim % t == 0:
                    return t
                t -= align
    return dim


def _pick_head_group(n_head, head_dim):
    """Smallest group of adjacent heads whose merged lane width is a 128-multiple."""
    for width in (256, 128):
        if width % head_dim == 0:
            g = width // head_dim
            if g >= 1 and n_head % g == 0:
                return g
    return n_head   # fall back to all heads merged (width == C, always legal)


# ----------------------------- wrapper -----------------------------

def attention_forward(hidden_states, params, n_head, scale=True, *,
                      mxu_dtype=jnp.bfloat16,
                      block_m=1024, block_n=512, block_q=512, block_k=1024,
                      masked_bias=-10000.0):
    """Forward of GPT-2 `Attention` (self-attention, no cache, eval mode)."""
    B, T, C = hidden_states.shape
    H = n_head
    assert C % H == 0
    hd = C // H

    G = _pick_head_group(H, hd)        # heads per group
    HG = H // G                        # number of head groups
    gd = G * hd                        # lane width of one head group

    BT = B * T
    bm = _fit_tile(BT, block_m, (16, 8))   # projection row tile (B folded into rows)
    bq = _fit_tile(T, block_q, (16, 8))    # attention query tile
    bk = _fit_tile(T, block_k, (16, 8))    # attention KV tile
    bn = _fit_tile(C, block_n, (128,))     # lane-dense c_proj output tile
    assert BT % bm == 0 and T % bq == 0 and T % bk == 0 and C % bn == 0
    nq, nk = T // bq, T // bk

    # ---- parameter layout transforms (weights only; cheap, hoistable) ------
    # c_attn: (C, 3C) -> per-(q|k|v, head-group) panels (3*HG, C, G*hd); the
    # 1/sqrt(hd) attention scale is folded into the Q panels.
    w_attn = params["c_attn_w"].reshape(C, 3, HG, gd).transpose(1, 2, 0, 3)
    b_attn = params["c_attn_b"].reshape(3, HG, 1, gd)
    if scale:
        s_vec = jnp.array([1.0 / float(hd) ** 0.5, 1.0, 1.0], jnp.float32)
        w_attn = w_attn * s_vec[:, None, None, None]
        b_attn = b_attn * s_vec[:, None, None, None]
    w3 = w_attn.reshape(3 * HG, C, gd).astype(mxu_dtype)
    b3 = b_attn.reshape(3 * HG, 1, gd).astype(jnp.float32)
    wp = params["c_proj_w"].astype(mxu_dtype)
    bp = params["c_proj_b"].reshape(1, C).astype(jnp.float32)

    x2 = hidden_states.reshape(BT, C).astype(mxu_dtype)
    sq = pl.Squeezed()

    # ---- 1) c_attn projection fused with head-group split -------------------
    # qkv[m*HG + hg, b*T + t, :] = x[b, t, :] @ W[m, hg] + bias[m, hg]
    qkv = pl.pallas_call(
        _bias_matmul_kernel,
        out_shape=jax.ShapeDtypeStruct((3 * HG, BT, gd), mxu_dtype),
        grid=(BT // bm, 3 * HG),
        in_specs=[
            pl.BlockSpec((bm, C), lambda i, p: (i, 0)),        # x tile stays resident over p
            pl.BlockSpec((sq, C, gd), lambda i, p: (p, 0, 0)),
            pl.BlockSpec((sq, 1, gd), lambda i, p: (p, 0, 0)),
        ],
        out_specs=pl.BlockSpec((sq, bm, gd), lambda i, p: (p, i, 0)),
        compiler_params=pltpu.CompilerParams(
            dimension_semantics=("parallel", "parallel")),
    )(x2, w3, b3)

    # ---- 2) causal flash attention (online softmax, G heads per grid point) --
    # Output is written head-MERGED directly into (B, T, C).
    flash = functools.partial(_flash_attn_kernel, block_q=bq, block_k=bk,
                              heads_per_group=G, head_dim=hd,
                              masked_bias=masked_bias)

    def q_map(g, qi, ki):
        return (g % HG, (g // HG) * nq + qi, 0)

    def make_kv_map(m):
        def kv_map(g, qi, ki):
            # Clamp the KV block index for causally-skipped tiles so the DMA is elided.
            kc = jnp.minimum(ki, ((qi + 1) * bq - 1) // bk)
            return (m * HG + (g % HG), (g // HG) * nk + kc, 0)
        return kv_map

    def o_map(g, qi, ki):
        return (g // HG, qi, g % HG)

    attn_merged = pl.pallas_call(
        flash,
        out_shape=jax.ShapeDtypeStruct((B, T, C), mxu_dtype),
        grid=(B * HG, nq, nk),
        in_specs=[
            pl.BlockSpec((sq, bq, gd), q_map),
            pl.BlockSpec((sq, bk, gd), make_kv_map(1)),
            pl.BlockSpec((sq, bk, gd), make_kv_map(2)),
        ],
        out_specs=pl.BlockSpec((sq, bq, gd), o_map),
        scratch_shapes=[
            pltpu.VMEM((bq, G), jnp.float32),    # running max (per head)
            pltpu.VMEM((bq, G), jnp.float32),    # running sum (per head)
            pltpu.VMEM((bq, gd), jnp.float32),   # head-merged output accumulator
        ],
        compiler_params=pltpu.CompilerParams(
            dimension_semantics=("parallel", "parallel", "arbitrary")),
    )(qkv, qkv, qkv)

    # ---- 3) c_proj: plain full-K GEMM on the already head-merged activations --
    a2 = attn_merged.reshape(BT, C)
    out = pl.pallas_call(
        _bias_matmul_kernel,
        out_shape=jax.ShapeDtypeStruct((BT, C), hidden_states.dtype),
        grid=(BT // bm, C // bn),
        in_specs=[
            pl.BlockSpec((bm, C), lambda i, j: (i, 0)),        # a tile resident over j
            pl.BlockSpec((C, bn), lambda i, j: (0, j)),
            pl.BlockSpec((1, bn), lambda i, j: (0, j)),
        ],
        out_specs=pl.BlockSpec((bm, bn), lambda i, j: (i, j)),
        compiler_params=pltpu.CompilerParams(
            dimension_semantics=("parallel", "parallel")),
    )(a2, wp, bp)

    return out.reshape(B, T, C)


# ----------------------------- pure-JAX reference -----------------------------

def attention_reference(x, params, n_head, scale=True, masked_bias=-10000.0):
    B, T, C = x.shape
    hd = C // n_head
    qkv = x @ params["c_attn_w"] + params["c_attn_b"]
    q, k, v = jnp.split(qkv, 3, axis=2)
    sh = lambda t: t.reshape(B, T, n_head, hd).transpose(0, 2, 1, 3)
    q, k, v = sh(q), sh(k), sh(v)
    w = jnp.einsum("bhqd,bhkd->bhqk", q, k)
    if scale:
        w = w / (float(hd) ** 0.5)
    mask = jnp.tril(jnp.ones((T, T), dtype=bool))
    w = jnp.where(mask, w, jnp.float32(masked_bias))
    w = jax.nn.softmax(w, axis=-1)
    a = jnp.einsum("bhqk,bhkd->bhqd", w, v)
    a = a.transpose(0, 2, 1, 3).reshape(B, T, C)
    return a @ params["c_proj_w"] + params["c_proj_b"]


# ----------------------------- main -----------------------------

if __name__ == "__main__":
    B, T, C, H = 2, 8, 32, 4   # batch, seq (== n_ctx), n_embd (nx), n_head

    key = jax.random.PRNGKey(0)
    k1, k2, k3, k4, kx = jax.random.split(key, 5)
    params = {
        "c_attn_w": 0.02 * jax.random.normal(k1, (C, 3 * C), jnp.float32),
        "c_attn_b": 0.02 * jax.random.normal(k2, (3 * C,), jnp.float32),
        "c_proj_w": 0.02 * jax.random.normal(k3, (C, C), jnp.float32),
        "c_proj_b": 0.02 * jax.random.normal(k4, (C,), jnp.float32),
    }
    x = jax.random.normal(kx, (B, T, C), jnp.float32)

    out = jax.block_until_ready(attention_forward(x, params, H, scale=True))
    ref = attention_reference(x, params, H, scale=True)

    assert out.shape == (B, T, C)
    max_err = jnp.max(jnp.abs(out - ref))
    # bf16 MXU operands + approx reciprocal => looser tolerance vs the f32 reference.
    assert jnp.allclose(out, ref, atol=2e-3, rtol=2e-2), \
        f"mismatch vs reference (max abs err {max_err})"
    print("KERNEL_OK")
</pallas_src>

<mosaic_0001>
module attributes {stable_mosaic.version = 11 : i64} {
  func.func @_bias_matmul_kernel(%arg0: i32, %arg1: i32, %arg2: memref<16x32xbf16, #tpu.memory_space<vmem>>, %arg3: memref<1x32x32xbf16, #tpu.memory_space<vmem>>, %arg4: memref<1x1x32xf32, #tpu.memory_space<vmem>>, %arg5: memref<1x16x32xbf16, #tpu.memory_space<vmem>>) attributes {dimension_semantics = [#tpu.dimension_semantics<parallel>, #tpu.dimension_semantics<parallel>], iteration_bounds = array<i64: 1, 3>, scalar_prefetch = 0 : i64, scratch_operands = 0 : i64, tpu.core_type = #tpu.core_type<tc>, window_params = [{transform_indices = @transform_0, window_bounds = array<i64: 16, 32>}, {transform_indices = @transform_1, window_bounds = array<i64: 1, 32, 32>}, {transform_indices = @transform_2, window_bounds = array<i64: 1, 1, 32>}, {transform_indices = @transform_3, window_bounds = array<i64: 1, 16, 32>}]} {
    %c0 = arith.constant 0 : index
    %c0_0 = arith.constant 0 : index
    %0 = vector.load %arg2[%c0, %c0_0] : memref<16x32xbf16, #tpu.memory_space<vmem>>, vector<16x32xbf16>
    %c0_1 = arith.constant 0 : index
    %c0_2 = arith.constant 0 : index
    %c0_3 = arith.constant 0 : index
    %1 = vector.load %arg3[%c0_1, %c0_2, %c0_3] : memref<1x32x32xbf16, #tpu.memory_space<vmem>>, vector<1x32x32xbf16>
    %2 = vector.shape_cast %1 : vector<1x32x32xbf16> to vector<32x32xbf16>
    %cst = arith.constant dense<0.000000e+00> : vector<16x32xf32>
    %3 = tpu.matmul %0, %2, %cst {dimension_numbers = #tpu.dot_dimension_numbers<[1], [0], [0], [1], [0, 0, 1, 1], [], []>} : vector<16x32xbf16>, vector<32x32xbf16>, vector<16x32xf32> -> vector<16x32xf32>
    %c0_4 = arith.constant 0 : index
    %c0_5 = arith.constant 0 : index
    %c0_6 = arith.constant 0 : index
    %4 = vector.load %arg4[%c0_4, %c0_5, %c0_6] : memref<1x1x32xf32, #tpu.memory_space<vmem>>, vector<1x1x32xf32>
    %5 = vector.shape_cast %4 : vector<1x1x32xf32> to vector<1x32xf32>
    %6 = vector.broadcast %5 : vector<1x32xf32> to vector<16x32xf32>
    %7 = arith.addf %3, %6 : vector<16x32xf32>
    %8 = arith.truncf %7 : vector<16x32xf32> to vector<16x32xbf16>
    %c0_7 = arith.constant 0 : index
    %c0_8 = arith.constant 0 : index
    %c0_9 = arith.constant 0 : index
    %9 = vector.load %arg5[%c0_7, %c0_8, %c0_9] : memref<1x16x32xbf16, #tpu.memory_space<vmem>>, vector<1x16x32xbf16>
    %10 = vector.shape_cast %9 : vector<1x16x32xbf16> to vector<16x32xbf16>
    %11 = vector.shape_cast %8 : vector<16x32xbf16> to vector<1x16x32xbf16>
    tpu.vector_store %arg5[%c0_7, %c0_8, %c0_9], %11 {strides = array<i32>} : memref<1x16x32xbf16, #tpu.memory_space<vmem>>, vector<1x16x32xbf16>,
    return
  }
  func.func @transform_0(%arg0: i32, %arg1: i32) -> (i32, i32) {
    %c0_i32 = arith.constant 0 : i32
    %c0_i32_0 = arith.constant 0 : i32
    return %arg0, %c0_i32 : i32, i32
  }
  func.func @transform_1(%arg0: i32, %arg1: i32) -> (i32, i32, i32) {
    %c0_i32 = arith.constant 0 : i32
    %c0_i32_0 = arith.constant 0 : i32
    %c0_i32_1 = arith.constant 0 : i32
    return %arg1, %c0_i32, %c0_i32_0 : i32, i32, i32
  }
  func.func @transform_2(%arg0: i32, %arg1: i32) -> (i32, i32, i32) {
    %c0_i32 = arith.constant 0 : i32
    %c0_i32_0 = arith.constant 0 : i32
    %c0_i32_1 = arith.constant 0 : i32
    return %arg1, %c0_i32, %c0_i32_0 : i32, i32, i32
  }
  func.func @transform_3(%arg0: i32, %arg1: i32) -> (i32, i32, i32) {
    %c0_i32 = arith.constant 0 : i32
    %c0_i32_0 = arith.constant 0 : i32
    return %arg1, %arg0, %c0_i32 : i32, i32, i32
  }
}

</mosaic_0001>

<llo_original>
// kernel: tpu_custom_call.1
$region0: #{tpu_custom_call.1}
  #allocation0 [shape = 'u32[]', space=smem, size = 0x4, offset = 0x4, fixed_abs, tag = 'smem constant byte address 0x4 - core index']
  #allocation1 [shape = 'u32[144,128]{1,0:T(1,128)}', space=vmem, size = 0x12000, scoped, tag = 'internal scratch']
  %s0 = inlined_call_operand.hbm [shape: bf16[16,32], index: 0, kind: input, shape index: {}]
  %s1 = inlined_call_operand.hbm [shape: bf16[3,32,32], index: 1, kind: input, shape index: {}]
  %s2 = inlined_call_operand.vmem [shape: f32[3,1,32], index: 2, kind: input, shape index: {}]
  %s3 = inlined_call_operand.hbm [shape: bf16[3,16,32], index: 3, kind: output, shape index: {}]
  %s4 = sld [smem:[#allocation0]]
  $region53: #{tpu_custom_call.1} parent=0
    _
  %s6 = ssub.s32 1, %s4
  %s7 = scalar_select 0, %s6, %s4
  $region1: #{tpu_custom_call.1} parent=0
    #allocation2 [shape = 'u8[4096]{0}', space=vmem, size = 0x1000, scoped, tag = 'input window, operand 0, single buffered']
    #allocation3 [shape = 's32[2]{0}', space=sflag, size = 0x8, scoped, tag = 'scoped memory for tpu_custom_call.1']
    #allocation4 [shape = 's32[2]{0}', space=sflag, size = 0x8, scoped, tag = 'scoped memory for tpu_custom_call.1']
    #allocation5 [shape = 'u8[16384]{0}', space=vmem, size = 0x4000, scoped, tag = 'input window, operand 1']
    #allocation6 [shape = 's32[2]{0}', space=sflag, size = 0x8, scoped, tag = 'scoped memory for tpu_custom_call.1']
    #allocation7 [shape = 'u8[8192]{0}', space=vmem, size = 0x2000, scoped, tag = 'output window, operand 0']
    %8 = vsyncpa [#allocation3], 0
    %9 = vsyncpa [#allocation6], 0
    %s10 = scalar_lea.sflag [#allocation6], 1
    %11 = vsyncpa %s10, 0
    %12 = vsyncpa [#allocation4], 0
    %s13 = scalar_lea.sflag [#allocation4], 1
    %14 = vsyncpa %s13, 0
    loop: start=0, step=1, limit=5
    $region2: #{tpu_custom_call.1} parent=1 // loop_pre_header
      _
    $region3: #{tpu_custom_call.1} parent=1 // loop_header
      %s16 = sphi 0, %s20
      %p17 = scmp.ge.s32.totalorder %s16, 5
      %s23 = sphi 0, %s35
      %s24 = sphi 0, %s31
      %s25 = sphi 0, %s23
      %s26 = sphi 0, %s24
      %s27 = sphi 0, %s25
      %s28 = sphi 0, %s26
      %s38 = sphi 0, %s40
      %s41 = sphi 0, %s38
      %s42 = sphi 0, %s41
      %s58 = sphi 0, %s42
      %s64 = sphi 0, %s66
      %s67 = sphi 0, %s64
      %s68 = sphi 0, %s67
      %s84 = sphi 0, %s68
      %s90 = sphi 0, %s92
      %s93 = sphi 0, %s90
      %s94 = sphi 0, %s93
      %s110 = sphi 0, %s94
      %s118 = sphi 0, %s120
      %s121 = sphi 0, %s118
      %s122 = sphi 0, %s121
      %s138 = sphi 0, %s122
    $region4: #{tpu_custom_call.1} parent=1 // loop_header_branch
      %19 = sbr.rel (%p17) target = $region8
    $region5: #{tpu_custom_call.1} parent=1 // loop_body
      %s21 = ssub.s32 %s16, 1
      %s22 = ssub.s32 %s16, 2
      %s29 = sadd.s32 1, %s24
      %p30 = scmp.ge.s32.totalorder %s29, 3
      %s31 = scalar_select %p30, 0, %s29
      %s32 = sadd.s32 1, %s23
      %s33 = scalar_select %p30, %s32, %s23
      %p34 = scmp.ge.s32.totalorder %s33, 1
      %s35 = scalar_select %p34, 0, %s33
      %s36 = ssub.s32 %s23, %s35
      %p37 = scmp.eq.s32.totalorder %s36, 0
      %s39 = sadd.s32 %s38, 1
      %s40 = scalar_select %p37, %s38, %s39
      %p43 = pneg %p37
      %p44 = scmp.eq.s32.totalorder %s16, 2
      %p45 = por %p43, %p44
      %p46 = scmp.ne.s32.totalorder %s38, %s41
      %p47 = scmp.eq.s32.totalorder %s16, 0
      %p48 = por %p46, %p47
      %p49 = scmp.ne.s32.totalorder %s38, %s41
      %p50 = scmp.eq.s32.totalorder %s21, 2
      %p51 = por %p49, %p50
      %p52 = scmp.ne.s32.totalorder %s41, %s42
      %p53 = scmp.eq.s32.totalorder %s21, 0
      %p54 = por %p52, %p53
      %p55 = scmp.ne.s32.totalorder %s41, %s42
      %p56 = scmp.eq.s32.totalorder %s22, 2
      %p57 = por %p55, %p56
      %p59 = scmp.ne.s32.totalorder %s42, %s58
      %p60 = scmp.eq.s32.totalorder %s22, 0
      %p61 = por %p59, %p60
      %s62 = ssub.s32 %s24, %s31
      %p63 = scmp.eq.s32.totalorder %s62, 0
      %s65 = sadd.s32 %s64, 1
      %s66 = scalar_select %p63, %s64, %s65
      %p69 = pneg %p63
      %p70 = scmp.eq.s32.totalorder %s16, 2
      %p71 = por %p69, %p70
      %p72 = scmp.ne.s32.totalorder %s64, %s67
      %p73 = scmp.eq.s32.totalorder %s16, 0
      %p74 = por %p72, %p73
      %p75 = scmp.ne.s32.totalorder %s64, %s67
      %p76 = scmp.eq.s32.totalorder %s21, 2
      %p77 = por %p75, %p76
      %p78 = scmp.ne.s32.totalorder %s67, %s68
      %p79 = scmp.eq.s32.totalorder %s21, 0
      %p80 = por %p78, %p79
      %p81 = scmp.ne.s32.totalorder %s67, %s68
      %p82 = scmp.eq.s32.totalorder %s22, 2
      %p83 = por %p81, %p82
      %p85 = scmp.ne.s32.totalorder %s68, %s84
      %p86 = scmp.eq.s32.totalorder %s22, 0
      %p87 = por %p85, %p86
      %s88 = ssub.s32 %s24, %s31
      %p89 = scmp.eq.s32.totalorder %s88, 0
      %s91 = sadd.s32 %s90, 1
      %s92 = scalar_select %p89, %s90, %s91
      %p95 = pneg %p89
      %p96 = scmp.eq.s32.totalorder %s16, 2
      %p97 = por %p95, %p96
      %p98 = scmp.ne.s32.totalorder %s90, %s93
      %p99 = scmp.eq.s32.totalorder %s16, 0
      %p100 = por %p98, %p99
      %p101 = scmp.ne.s32.totalorder %s90, %s93
      %p102 = scmp.eq.s32.totalorder %s21, 2
      %p103 = por %p101, %p102
      %p104 = scmp.ne.s32.totalorder %s93, %s94
      %p105 = scmp.eq.s32.totalorder %s21, 0
      %p106 = por %p104, %p105
      %p107 = scmp.ne.s32.totalorder %s93, %s94
      %p108 = scmp.eq.s32.totalorder %s22, 2
      %p109 = por %p107, %p108
      %p111 = scmp.ne.s32.totalorder %s94, %s110
      %p112 = scmp.eq.s32.totalorder %s22, 0
      %p113 = por %p111, %p112
      %s114 = ssub.s32 %s24, %s31
      %s115 = ssub.s32 %s23, %s35
      %s116 = sor.u32 %s114, %s115
      %p117 = scmp.eq.s32.totalorder %s116, 0
      %s119 = sadd.s32 %s118, 1
      %s120 = scalar_select %p117, %s118, %s119
      %p123 = pneg %p117
      %p124 = scmp.eq.s32.totalorder %s16, 2
      %p125 = por %p123, %p124
      %p126 = scmp.ne.s32.totalorder %s118, %s121
      %p127 = scmp.eq.s32.totalorder %s16, 0
      %p128 = por %p126, %p127
      %p129 = scmp.ne.s32.totalorder %s118, %s121
      %p130 = scmp.eq.s32.totalorder %s21, 2
      %p131 = por %p129, %p130
      %p132 = scmp.ne.s32.totalorder %s121, %s122
      %p133 = scmp.eq.s32.totalorder %s21, 0
      %p134 = por %p132, %p133
      %p135 = scmp.ne.s32.totalorder %s121, %s122
      %p136 = scmp.eq.s32.totalorder %s22, 2
      %p137 = por %p135, %p136
      %p139 = scmp.ne.s32.totalorder %s122, %s138
      %p140 = scmp.eq.s32.totalorder %s22, 0
      %p141 = por %p139, %p140
      %p142 = scmp.le.s32.totalorder 1, %s16
      %p143 = scmp.lt.s32.totalorder %s16, 4
      %p144 = pnand %p142, %p143
      %p145 = pneg %p144
      // Predicated region
      $region9: #{tpu_custom_call.1} parent=5 // pred_check
        _
      $region10: #{tpu_custom_call.1} parent=5 // pred_check_branch
        %147 = sbr.rel (%p144) target = $region12
      $region11: #{tpu_custom_call.1} parent=5 // pred_region
        %s148 = ssub.s32 %s16, 1
        // Predicated region
        $region13: #{tpu_custom_call.1} parent=11 // pred_check
          %p149 = pneg %p54
        $region14: #{tpu_custom_call.1} parent=11 // pred_check_branch
          %151 = sbr.rel (%p149) target = $region16
        $region15: #{tpu_custom_call.1} parent=11 // pred_region
          %s152 = smul.u32 2, %s25
          %s154 = ssub.s32 128, 128
          %155 = vsyncadd [#allocation3], %s154
          %s156 = smul.addr %s152, 64
          %s157 = scalar_lea.hbm %s0, %s156
          %s158 = sshll.u32 [#allocation2], 4
          %s159 = int_to_ptr.vmem [resolvable:$true] %s158
          %164 = dma.hbm_to_vmem [thread:$0]  %s157, 128, %s159, [#allocation3], 64, 64, 4
        $region16: #{tpu_custom_call.1} parent=11 // pred_fallthru
          _
      $region12: #{tpu_custom_call.1} parent=5 // pred_fallthru
        _
      %p165 = scmp.lt.s32.totalorder %s16, 3
      // Predicated region
      $region17: #{tpu_custom_call.1} parent=5 // pred_check
        %p166 = pneg %p165
      $region18: #{tpu_custom_call.1} parent=5 // pred_check_branch
        %168 = sbr.rel (%p166) target = $region20
      $region19: #{tpu_custom_call.1} parent=5 // pred_region
        // Predicated region
        $region21: #{tpu_custom_call.1} parent=19 // pred_check
          %p169 = pneg %p74
        $region22: #{tpu_custom_call.1} parent=19 // pred_check_branch
          %171 = sbr.rel (%p169) target = $region24
        $region23: #{tpu_custom_call.1} parent=19 // pred_region
          %s172 = sand.u32 %s64, 1
          %s173 = scalar_lea.sflag [#allocation6], %s172
          %s174 = sand.u32 %s64, 1
          %s175 = smul.addr %s174, 16
          %s176 = scalar_lea.vmem [#allocation5], %s175
          %s178 = ssub.s32 256, 256
          %179 = vsyncadd %s173, %s178
          %s180 = smul.addr %s24, 4
          %s181 = smul.addr %s180, 64
          %s182 = scalar_lea.hbm %s1, %s181
          %s183 = sshll.u32 %s176, 4
          %s184 = int_to_ptr.vmem [resolvable:$true] %s183
          %189 = dma.hbm_to_vmem [thread:$0]  %s182, 256, %s184, %s173, 64, 64, 4
        $region24: #{tpu_custom_call.1} parent=19 // pred_fallthru
          _
        // Predicated region
        $region25: #{tpu_custom_call.1} parent=19 // pred_check
          %p190 = pneg %p100
        $region26: #{tpu_custom_call.1} parent=19 // pred_check_branch
          %192 = sbr.rel (%p190) target = $region28
        $region27: #{tpu_custom_call.1} parent=19 // pred_region
          %p193 = scmp.lt.s32.totalorder %s24, 2
          %s194 = scalar_select %p193, %s24, 2
          %s195 = scalar_lea.vmem %s2, %s194
        $region28: #{tpu_custom_call.1} parent=19 // pred_fallthru
          _
      $region20: #{tpu_custom_call.1} parent=5 // pred_fallthru
        _
      %p196 = scmp.le.s32.totalorder 1, %s16
      %p197 = scmp.lt.s32.totalorder %s16, 4
      %p198 = pnand %p196, %p197
      %p199 = pneg %p198
      // Predicated region
      $region29: #{tpu_custom_call.1} parent=5 // pred_check
        _
      $region30: #{tpu_custom_call.1} parent=5 // pred_check_branch
        %201 = sbr.rel (%p198) target = $region32
      $region31: #{tpu_custom_call.1} parent=5 // pred_region
        %s202 = ssub.s32 %s16, 1
        // Predicated region
        $region33: #{tpu_custom_call.1} parent=31 // pred_check
          %p203 = pneg %p54
        $region34: #{tpu_custom_call.1} parent=31 // pred_check_branch
          %205 = sbr.rel (%p203) target = $region36
        $region35: #{tpu_custom_call.1} parent=31 // pred_region
          %206 = dma.done [#allocation3], 128
        $region36: #{tpu_custom_call.1} parent=31 // pred_fallthru
          _
        %s207 = sand.u32 %s67, 1
        %s208 = scalar_lea.sflag [#allocation6], %s207
        %s209 = sand.u32 %s67, 1
        %s210 = smul.addr %s209, 16
        %s211 = scalar_lea.vmem [#allocation5], %s210
        // Predicated region
        $region37: #{tpu_custom_call.1} parent=31 // pred_check
          %p212 = pneg %p80
        $region38: #{tpu_custom_call.1} parent=31 // pred_check_branch
          %214 = sbr.rel (%p212) target = $region40
        $region39: #{tpu_custom_call.1} parent=31 // pred_region
          %215 = dma.done %s208, 256
        $region40: #{tpu_custom_call.1} parent=31 // pred_fallthru
          _
        %p216 = pneg %p54
        %p217 = pneg %p51
        %s218 = sand.u32 %s67, 1
        %s219 = scalar_lea.sflag [#allocation6], %s218
        %s220 = sand.u32 %s67, 1
        %s221 = smul.addr %s220, 16
        %s222 = scalar_lea.vmem [#allocation5], %s221
        %p223 = pneg %p80
        %p224 = pneg %p77
        %p225 = scmp.lt.s32.totalorder %s26, 2
        %s226 = scalar_select %p225, %s26, 2
        %s227 = scalar_lea.vmem %s2, %s226
        %p228 = pneg %p106
        %p229 = pneg %p103
        %p230 = pneg %p134
        %p231 = pneg %p131
        %s232 = sand.u32 %s121, 1
        %s233 = scalar_lea.sflag [#allocation4], %s232
        %s234 = sand.u32 %s121, 1
        %s235 = smul.addr %s234, 8
        %s236 = scalar_lea.vmem [#allocation7], %s235
        %s237 = smul.u32 2, %s25
        %p238 = scmp.lt.s32.totalorder %s26, 2
        %s239 = scalar_select %p238, %s26, 2
        %s240 = scalar_lea.vmem %s2, %s239
        %s241 = smul.u32 2, %s25
        %v243 = vld [vmem:[#allocation2] sm:$0xf]
        %v244 = vld [vmem:[#allocation2 + $0x4] sm:$0xf]
        %v245 = vld [vmem:[%s211] sm:$0xf]
        %v246 = vld [vmem:[%s211 + $0x4] sm:$0xf]
        %v247 = vld [vmem:[%s211 + $0x8] sm:$0xf]
        %v248 = vld [vmem:[%s211 + $0xc] sm:$0xf]
        %v249 = vld [vmem:[%s240] sm:$0x1]
        %v251 = vlaneseq
        %v252 = vshrl.u32 %v251, 7
        %v253 = vsub.s32 0, %v252
        %v254 = vrot.slane %v249, %v253
        %v258 = vunpack.c.l.b16 %v243
        %v259 = vunpack.c.l.b16 %v244
        %v260 = vpack.c.b16 %v259, %v258
        %v265 = vunpack.c.l.b16 %v245
        %v266 = vunpack.c.l.b16 %v246
        %v267 = vunpack.c.l.b16 %v247
        %v268 = vunpack.c.l.b16 %v248
        %v269 = vpack.c.b16 %v266, %v265
        %v270 = vpack.c.b16 %v268, %v267
        %vm273 = vcmask 261120
        %v275 = vsel %vm273, %v260, 0
        %277 = vmatprep.subr.bf16.mxu0 0
        %278 = vmatpush1.bf16.msra.mxu0 0
        %279 = vmatprep.subr.bf16.mxu0 0
        %280 = vmatpush1.bf16.msra.mxu0 0
        %281 = vmatprep.subr.bf16.mxu0 0
        %282 = vmatpush1.bf16.msra.mxu0 0
        %283 = vmatprep.subr.bf16.mxu0 0
        %284 = vmatpush1.bf16.msra.mxu0 0
        %285 = vmatprep.subr.bf16.mxu0 0
        %286 = vmatpush1.bf16.msra.mxu0 0
        %287 = vmatprep.subr.bf16.mxu0 0
        %288 = vmatpush1.bf16.msra.mxu0 0
        %289 = vmatprep.subr.bf16.mxu0 0
        %290 = vmatpush1.bf16.msra.mxu0 %v270
        %291 = vmatprep.subr.bf16.mxu0 0
        %292 = vmatpush1.bf16.msra.mxu0 %v269
        %293 = vmatprep.subr.bf16.mxu0 0
        %294 = vmatpush2.bf16.msra.mxu0 0
        %295 = vmatprep.subr.bf16.mxu0 0
        %296 = vmatpush2.bf16.msra.mxu0 0
        %297 = vmatprep.subr.bf16.mxu0 0
        %298 = vmatpush2.bf16.msra.mxu0 0
        %299 = vmatprep.subr.bf16.mxu0 0
        %300 = vmatpush2.bf16.msra.mxu0 0
        %301 = vmatprep.subr.bf16.mxu0 0
        %302 = vmatpush2.bf16.msra.mxu0 0
        %303 = vmatprep.subr.bf16.mxu0 0
        %304 = vmatpush2.bf16.msra.mxu0 0
        %305 = vmatprep.subr.bf16.mxu0 0
        %306 = vmatpush2.bf16.msra.mxu0 0
        %307 = vmatprep.subr.bf16.mxu0 0
        %308 = vmatpush2.bf16.msra.mxu0 0
        %309 = vmatprep.mubr.bf16.mxu0 0
        %310 = vmatmul.mubr.bf16.gmra.mxu0 %v275
        %v311 = vpop.f32.mrf.mxu0
        %v312 = vadd.f32 %v254, %v311
        %v313 = vpop.f32.mrf.mxu0
        %v314 = vpop.f32.mrf.mxu0
        %v315 = vadd.f32 %v254, %v314
        %v316 = vpop.f32.mrf.mxu0
        %317 = vdwg.mxu0
        %v318 = vpack.c.bf16 %v315, %v312
        %v320 = vunpack.c.l.b16 %v318
        %v321 = vunpack.c.h.b16 %v318
        %v322 = vpack.c.b16 %v320, %v320
        %v323 = vpack.c.b16 %v321, %v321
        %vm326 = vcmask 257024
        %327 = vst.msk [vmem:[%s236] sm:$0xf] %vm326, %v322
        %328 = vst.msk [vmem:[%s236 + $0x4] sm:$0xf] %vm326, %v323
        %s329 = sand.u32 %s121, 1
        %s330 = scalar_lea.sflag [#allocation4], %s329
        %s331 = sand.u32 %s121, 1
        %s332 = smul.addr %s331, 8
        %s333 = scalar_lea.vmem [#allocation7], %s332
        // Predicated region
        $region41: #{tpu_custom_call.1} parent=31 // pred_check
          %p334 = pneg %p131
        $region42: #{tpu_custom_call.1} parent=31 // pred_check_branch
          %336 = sbr.rel (%p334) target = $region44
        $region43: #{tpu_custom_call.1} parent=31 // pred_region
          %s337 = smul.u32 2, %s25
          %s339 = ssub.s32 128, 128
          %340 = vsyncadd %s330, %s339
          %s341 = smul.addr %s26, 2
          %s342 = sadd.s32 %s337, %s341
          %s343 = smul.addr %s342, 64
          %s344 = scalar_lea.hbm %s3, %s343
          %s345 = sshll.u32 %s333, 4
          %s346 = int_to_ptr.vmem [resolvable:$true] %s345
          %351 = dma.vmem_to_hbm [thread:$0]  %s346, 128, %s344, %s330, 64, 64, 4
        $region44: #{tpu_custom_call.1} parent=31 // pred_fallthru
          _
      $region32: #{tpu_custom_call.1} parent=5 // pred_fallthru
        _
      %p352 = scmp.le.s32.totalorder 2, %s16
      // Predicated region
      $region45: #{tpu_custom_call.1} parent=5 // pred_check
        %p353 = pneg %p352
      $region46: #{tpu_custom_call.1} parent=5 // pred_check_branch
        %355 = sbr.rel (%p353) target = $region48
      $region47: #{tpu_custom_call.1} parent=5 // pred_region
        %s356 = ssub.s32 %s16, 2
        // Predicated region
        $region49: #{tpu_custom_call.1} parent=47 // pred_check
          %p357 = pneg %p137
        $region50: #{tpu_custom_call.1} parent=47 // pred_check_branch
          %359 = sbr.rel (%p357) target = $region52
        $region51: #{tpu_custom_call.1} parent=47 // pred_region
          %s360 = sand.u32 %s122, 1
          %s361 = scalar_lea.sflag [#allocation4], %s360
          %s362 = sand.u32 %s122, 1
          %s363 = smul.addr %s362, 8
          %s364 = scalar_lea.vmem [#allocation7], %s363
          %365 = dma.done %s361, 128
        $region52: #{tpu_custom_call.1} parent=47 // pred_fallthru
          _
      $region48: #{tpu_custom_call.1} parent=5 // pred_fallthru
        _
    $region6: #{tpu_custom_call.1} parent=1 // loop_footer
      %s20 = sadd.s32 1, %s16
    $region7: #{tpu_custom_call.1} parent=1 // loop_footer_branch
      %15 = sbr.rel target = $region3
    $region8: #{tpu_custom_call.1} parent=1 // loop_exit
      _
    %366 = vsyncpa [#allocation3], 1
    %s367 = scalar_lea.sflag [#allocation3], 1
    %368 = vsyncpa %s367, 1
    %369 = vsyncpa [#allocation6], 1
    %s370 = scalar_lea.sflag [#allocation6], 1
    %371 = vsyncpa %s370, 1
    %372 = vsyncpa [#allocation4], 1
    %s373 = scalar_lea.sflag [#allocation4], 1
    %374 = vsyncpa %s373, 1

</llo_original>
